<compile_context>
chip_gen: v5e
topology: v5e:2x2
jax: 0.10.0
libtpu: 0.0.40
codegen_flags: <defaults>
</compile_context>

<pallas_src>
import functools

import jax
import jax.numpy as jnp
import numpy as np
from jax.experimental import pallas as pl
from jax.experimental.pallas import tpu as pltpu


def phase_shuffle_kernel(k_ref, x_ref, o_ref, pad_ref, *, n, W):
    """x_ref/o_ref: (c_block, T) unpadded blocks; pad_ref: (c_block, W) VMEM scratch."""
    b = pl.program_id(0)                 # batch index (grid axis 0)
    k = k_ref[b]                         # per-sample shift, int32 scalar in SMEM
    x = x_ref[...]                       # native dtype, no widening
    T = x.shape[-1]

    # Assemble the reflect-padded row in VMEM (no HBM pad traffic).
    pad_ref[:, :T] = x                                                   # lane-aligned bulk copy
    for j in range(n):                   # n is tiny & static -> fully unrolled, 2n lane copies
        pad_ref[:, T + j : T + j + 1] = x[:, T - 2 - j : T - 1 - j]      # right reflection
        pad_ref[:, W - n + j : W - n + j + 1] = x[:, n - j : n - j + 1]  # left reflection (tail)

    # out[:, i] = pad[:, (i - k) mod W] == roll(pad, k)[:, i].
    # Conditional add instead of an integer modulo (k in [-n, n], one wrap suffices).
    s = k + jnp.where(k < 0, W, 0)
    rolled = pltpu.roll(pad_ref[...], s, axis=1)   # single dynamic XLU lane rotate
    o_ref[...] = rolled[:, :T]


def _pick_c_block(C, T, itemsize, target_bytes=1 << 20):
    """Largest divisor of C that is a multiple of the sublane tile and keeps one
    (c_block, T) slab around ~1 MiB, so blocks double-buffer comfortably inside
    v7x's smaller VMEM and the (B, C_tiles) grid has enough parallel steps."""
    sublane = max(1, 32 // itemsize)            # f32: 8, bf16: 16, int8: 32
    max_rows = max(1, target_bytes // max(1, T * itemsize))
    if C <= max_rows:
        return C                                # full dim -> always layout-legal
    best = None
    d = sublane
    while d <= max_rows:
        if C % d == 0:
            best = d
        d += sublane
    return best if best is not None else C


def phase_shuffle(x, k, shift_factor, *, c_block=None):
    """x: (B, C, T) array, k: (B,) int32 shifts in [-shift_factor, shift_factor]."""
    if shift_factor == 0:
        return x
    B, C, T = x.shape
    n = int(shift_factor)
    assert n < T, "shift_factor must be smaller than the time length"
    k = k.astype(jnp.int32)

    itemsize = x.dtype.itemsize
    if c_block is None:
        c_block = _pick_c_block(C, T, itemsize)
    assert C % c_block == 0
    num_cb = C // c_block

    # VMEM-only scratch width (rounded to a lane multiple so the dynamic rotate is
    # full-width/unmasked).  This padding never touches HBM.
    W = ((T + 2 * n + 127) // 128) * 128

    grid_spec = pltpu.PrefetchScalarGridSpec(
        num_scalar_prefetch=1,
        grid=(B, num_cb),
        in_specs=[
            pl.BlockSpec((pl.Squeezed(), c_block, T), lambda b, c, k_ref: (b, c, 0)),
        ],
        out_specs=pl.BlockSpec((pl.Squeezed(), c_block, T), lambda b, c, k_ref: (b, c, 0)),
        scratch_shapes=[pltpu.VMEM((c_block, W), x.dtype)],
    )
    kernel = functools.partial(phase_shuffle_kernel, n=n, W=W)
    return pl.pallas_call(
        kernel,
        out_shape=jax.ShapeDtypeStruct((B, C, T), x.dtype),
        grid_spec=grid_spec,
        compiler_params=pltpu.CompilerParams(
            dimension_semantics=("parallel", "parallel")),
        cost_estimate=pl.CostEstimate(
            flops=0, transcendentals=0,
            bytes_accessed=2 * B * C * T * itemsize + B * 4),
    )(k, x)


def phase_shuffle_reference(x, k):
    """Pure-JAX reference of the PyTorch forward (reflect-padded shift)."""
    B, C, T = x.shape
    i = jnp.arange(T)[None, :]            # (1, T)
    r = i - k[:, None]                    # (B, T)
    r = jnp.where(r < 0, -r, r)
    r = jnp.where(r > T - 1, 2 * (T - 1) - r, r)
    return jnp.take_along_axis(x, r[:, None, :], axis=-1)


if __name__ == "__main__":
    shift_factor = 2            # module hyper-parameter (no learned weights)

    key = jax.random.PRNGKey(0)
    kx, kk, kx2 = jax.random.split(key, 3)

    # Small config matching the module's typical toy use.
    B, C, T = 2, 4, 16
    x = jax.random.normal(kx, (B, C, T), dtype=jnp.float32)
    # deterministic per-sample shifts, same distribution as torch's random_(0, 2n+1) - n
    k = jax.random.randint(kk, (B,), -shift_factor, shift_factor + 1, dtype=jnp.int32)
    out = jax.block_until_ready(phase_shuffle(x, k, shift_factor))
    assert out.shape == x.shape and out.dtype == x.dtype
    # Pure data movement in native dtype: results must match bit-exactly.
    np.testing.assert_array_equal(np.asarray(out), np.asarray(phase_shuffle_reference(x, k)))

    # Second config: every shift value in {-2..2}, non-128-multiple T, C tiled into
    # two parallel blocks (exercises the (B, C_tiles) grid and edge fix-up paths).
    B2, C2, T2 = 5, 16, 200
    x2 = jax.random.normal(kx2, (B2, C2, T2), dtype=jnp.float32)
    k2 = jnp.array([-2, -1, 0, 1, 2], dtype=jnp.int32)
    out2 = jax.block_until_ready(phase_shuffle(x2, k2, shift_factor, c_block=8))
    np.testing.assert_array_equal(np.asarray(out2), np.asarray(phase_shuffle_reference(x2, k2)))

    print("KERNEL_OK")
</pallas_src>

<mosaic_0001>
module attributes {stable_mosaic.version = 11 : i64} {
  func.func @phase_shuffle_kernel(%arg0: i32, %arg1: i32, %arg2: memref<2xi32, #tpu.memory_space<smem>>, %arg3: memref<1x4x16xf32, #tpu.memory_space<vmem>>, %arg4: memref<1x4x16xf32, #tpu.memory_space<vmem>>, %arg5: memref<4x128xf32, #tpu.memory_space<vmem>>) attributes {dimension_semantics = [#tpu.dimension_semantics<parallel>, #tpu.dimension_semantics<parallel>], iteration_bounds = array<i64: 2, 1>, scalar_prefetch = 1 : i64, scratch_operands = 1 : i64, tpu.core_type = #tpu.core_type<tc>, window_params = [{transform_indices = @transform_0, window_bounds = array<i64: 1, 4, 16>}, {transform_indices = @transform_1, window_bounds = array<i64: 1, 4, 16>}]} {
    %0 = arith.index_cast %arg0 : i32 to index
    %1 = memref.load %arg2[%0] : memref<2xi32, #tpu.memory_space<smem>>
    %c0 = arith.constant 0 : index
    %c0_0 = arith.constant 0 : index
    %c0_1 = arith.constant 0 : index
    %2 = vector.load %arg3[%c0, %c0_0, %c0_1] : memref<1x4x16xf32, #tpu.memory_space<vmem>>, vector<1x4x16xf32>
    %3 = vector.shape_cast %2 : vector<1x4x16xf32> to vector<4x16xf32>
    %c0_2 = arith.constant 0 : index
    %c0_3 = arith.constant 0 : index
    %4 = vector.load %arg5[%c0_2, %c0_3] : memref<4x128xf32, #tpu.memory_space<vmem>>, vector<4x16xf32>
    tpu.vector_store %arg5[%c0_2, %c0_3], %3 {strides = array<i32>} : memref<4x128xf32, #tpu.memory_space<vmem>>, vector<4x16xf32>,
    %5 = vector.extract_strided_slice %3 {offsets = [0, 14], sizes = [4, 1], strides = [1, 1]} : vector<4x16xf32> to vector<4x1xf32>
    %c0_4 = arith.constant 0 : index
    %c16 = arith.constant 16 : index
    %6 = vector.load %arg5[%c0_4, %c16] : memref<4x128xf32, #tpu.memory_space<vmem>>, vector<4x1xf32>
    tpu.vector_store %arg5[%c0_4, %c16], %5 {strides = array<i32>} : memref<4x128xf32, #tpu.memory_space<vmem>>, vector<4x1xf32>,
    %7 = vector.extract_strided_slice %3 {offsets = [0, 2], sizes = [4, 1], strides = [1, 1]} : vector<4x16xf32> to vector<4x1xf32>
    %c0_5 = arith.constant 0 : index
    %c126 = arith.constant 126 : index
    %8 = vector.load %arg5[%c0_5, %c126] : memref<4x128xf32, #tpu.memory_space<vmem>>, vector<4x1xf32>
    tpu.vector_store %arg5[%c0_5, %c126], %7 {strides = array<i32>} : memref<4x128xf32, #tpu.memory_space<vmem>>, vector<4x1xf32>,
    %9 = vector.extract_strided_slice %3 {offsets = [0, 13], sizes = [4, 1], strides = [1, 1]} : vector<4x16xf32> to vector<4x1xf32>
    %c0_6 = arith.constant 0 : index
    %c17 = arith.constant 17 : index
    %10 = vector.load %arg5[%c0_6, %c17] : memref<4x128xf32, #tpu.memory_space<vmem>>, vector<4x1xf32>
    tpu.vector_store %arg5[%c0_6, %c17], %9 {strides = array<i32>} : memref<4x128xf32, #tpu.memory_space<vmem>>, vector<4x1xf32>,
    %11 = vector.extract_strided_slice %3 {offsets = [0, 1], sizes = [4, 1], strides = [1, 1]} : vector<4x16xf32> to vector<4x1xf32>
    %c0_7 = arith.constant 0 : index
    %c127 = arith.constant 127 : index
    %12 = vector.load %arg5[%c0_7, %c127] : memref<4x128xf32, #tpu.memory_space<vmem>>, vector<4x1xf32>
    tpu.vector_store %arg5[%c0_7, %c127], %11 {strides = array<i32>} : memref<4x128xf32, #tpu.memory_space<vmem>>, vector<4x1xf32>,
    %c0_i32 = arith.constant 0 : i32
    %13 = arith.cmpi slt, %1, %c0_i32 : i32
    %c128_i32 = arith.constant 128 : i32
    %c0_i32_8 = arith.constant 0 : i32
    %14 = arith.select %13, %c128_i32, %c0_i32_8 : i32
    %15 = arith.addi %1, %14 : i32
    %c0_9 = arith.constant 0 : index
    %c0_10 = arith.constant 0 : index
    %16 = vector.load %arg5[%c0_9, %c0_10] : memref<4x128xf32, #tpu.memory_space<vmem>>, vector<4x128xf32>
    %17 = tpu.dynamic_rotate %16 by %15 dim 1 : vector<4x128xf32>, i32 -> vector<4x128xf32>
    %18 = vector.extract_strided_slice %17 {offsets = [0, 0], sizes = [4, 16], strides = [1, 1]} : vector<4x128xf32> to vector<4x16xf32>
    %c0_11 = arith.constant 0 : index
    %c0_12 = arith.constant 0 : index
    %c0_13 = arith.constant 0 : index
    %19 = vector.load %arg4[%c0_11, %c0_12, %c0_13] : memref<1x4x16xf32, #tpu.memory_space<vmem>>, vector<1x4x16xf32>
    %20 = vector.shape_cast %19 : vector<1x4x16xf32> to vector<4x16xf32>
    %21 = vector.shape_cast %18 : vector<4x16xf32> to vector<1x4x16xf32>
    tpu.vector_store %arg4[%c0_11, %c0_12, %c0_13], %21 {strides = array<i32>} : memref<1x4x16xf32, #tpu.memory_space<vmem>>, vector<1x4x16xf32>,
    return
  }
  func.func @transform_0(%arg0: i32, %arg1: i32, %arg2: memref<2xi32, #tpu.memory_space<smem>>) -> (i32, i32, i32) {
    %c0_i32 = arith.constant 0 : i32
    %c0_i32_0 = arith.constant 0 : i32
    return %arg0, %arg1, %c0_i32 : i32, i32, i32
  }
  func.func @transform_1(%arg0: i32, %arg1: i32, %arg2: memref<2xi32, #tpu.memory_space<smem>>) -> (i32, i32, i32) {
    %c0_i32 = arith.constant 0 : i32
    %c0_i32_0 = arith.constant 0 : i32
    return %arg0, %arg1, %c0_i32 : i32, i32, i32
  }
}

</mosaic_0001>

<llo_original>
// kernel: tpu_custom_call.1
$region0: #{tpu_custom_call.1}
  #allocation0 [shape = 'u32[]', space=smem, size = 0x4, offset = 0x4, fixed_abs, tag = 'smem constant byte address 0x4 - core index']
  #allocation1 [shape = 'u32[72,128]{1,0:T(1,128)}', space=vmem, size = 0x9000, scoped, tag = 'internal scratch']
  #allocation2 [shape = 'f32[4,128]{1,0:T(4,128)}', space=vmem, size = 0x800, scoped, tag = 'scratch operand']
  #allocation3 [shape = 's32[1]{0}', space=sflag, size = 0x4, scoped, tag = 'scoped memory for tpu_custom_call.1']
  #allocation4 [shape = 'u8[512]{0}', space=smem, size = 0x200, scoped, tag = 'prefetched SMEM operand 0']
  %s0 = inlined_call_operand.hbm [shape: s32[2], index: 0, kind: input, shape index: {}]
  %s1 = inlined_call_operand.hbm [shape: f32[2,4,16], index: 1, kind: input, shape index: {}]
  %s2 = inlined_call_operand.hbm [shape: f32[2,4,16], index: 2, kind: output, shape index: {}]
  %s3 = sld [smem:[#allocation0]]
  $region41: #{tpu_custom_call.1} parent=0
    _
  %s5 = ssub.s32 1, %s3
  %s6 = scalar_select 0, %s5, %s3
  %s8 = sshll.u32 %s0, 4
  %s9 = int_to_ptr.hbm [resolvable:$true] %s8
  %11 = dma.hbm_to_smem %s9, 16, [#allocation4], [#allocation3]
  %13 = dma.done [#allocation3], 16
  %14 = sfence
  $region1: #{tpu_custom_call.1} parent=0
    #allocation5 [shape = 'u8[4096]{0}', space=vmem, size = 0x1000, scoped, tag = 'input window, operand 1']
    #allocation6 [shape = 's32[2]{0}', space=sflag, size = 0x8, scoped, tag = 'scoped memory for tpu_custom_call.1']
    #allocation7 [shape = 's32[2]{0}', space=sflag, size = 0x8, scoped, tag = 'scoped memory for tpu_custom_call.1']
    #allocation8 [shape = 'u8[4096]{0}', space=vmem, size = 0x1000, scoped, tag = 'output window, operand 0']
    %15 = vsyncpa [#allocation6], 0
    %s16 = scalar_lea.sflag [#allocation6], 1
    %17 = vsyncpa %s16, 0
    %18 = vsyncpa [#allocation7], 0
    %s19 = scalar_lea.sflag [#allocation7], 1
    %20 = vsyncpa %s19, 0
    loop: start=0, step=1, limit=4
    $region2: #{tpu_custom_call.1} parent=1 // loop_pre_header
      _
    $region3: #{tpu_custom_call.1} parent=1 // loop_header
      %s22 = sphi 0, %s26
      %p23 = scmp.ge.s32.totalorder %s22, 4
      %s29 = sphi 0, %s41
      %s30 = sphi 0, %s37
      %s31 = sphi 0, %s29
      %s32 = sphi 0, %s30
      %s33 = sphi 0, %s31
      %s34 = sphi 0, %s32
      %s46 = sphi 0, %s48
      %s49 = sphi 0, %s46
      %s50 = sphi 0, %s49
      %s66 = sphi 0, %s50
      %s74 = sphi 0, %s76
      %s77 = sphi 0, %s74
      %s78 = sphi 0, %s77
      %s94 = sphi 0, %s78
    $region4: #{tpu_custom_call.1} parent=1 // loop_header_branch
      %25 = sbr.rel (%p23) target = $region8
    $region5: #{tpu_custom_call.1} parent=1 // loop_body
      %s27 = ssub.s32 %s22, 1
      %s28 = ssub.s32 %s22, 2
      %s35 = sadd.s32 1, %s30
      %p36 = scmp.ge.s32.totalorder %s35, 1
      %s37 = scalar_select %p36, 0, %s35
      %s38 = sadd.s32 1, %s29
      %s39 = scalar_select %p36, %s38, %s29
      %p40 = scmp.ge.s32.totalorder %s39, 2
      %s41 = scalar_select %p40, 0, %s39
      %s42 = ssub.s32 %s29, %s41
      %s43 = ssub.s32 %s30, %s37
      %s44 = sor.u32 %s42, %s43
      %p45 = scmp.eq.s32.totalorder %s44, 0
      %s47 = sadd.s32 %s46, 1
      %s48 = scalar_select %p45, %s46, %s47
      %p51 = pneg %p45
      %p52 = scmp.eq.s32.totalorder %s22, 1
      %p53 = por %p51, %p52
      %p54 = scmp.ne.s32.totalorder %s46, %s49
      %p55 = scmp.eq.s32.totalorder %s22, 0
      %p56 = por %p54, %p55
      %p57 = scmp.ne.s32.totalorder %s46, %s49
      %p58 = scmp.eq.s32.totalorder %s27, 1
      %p59 = por %p57, %p58
      %p60 = scmp.ne.s32.totalorder %s49, %s50
      %p61 = scmp.eq.s32.totalorder %s27, 0
      %p62 = por %p60, %p61
      %p63 = scmp.ne.s32.totalorder %s49, %s50
      %p64 = scmp.eq.s32.totalorder %s28, 1
      %p65 = por %p63, %p64
      %p67 = scmp.ne.s32.totalorder %s50, %s66
      %p68 = scmp.eq.s32.totalorder %s28, 0
      %p69 = por %p67, %p68
      %s70 = ssub.s32 %s29, %s41
      %s71 = ssub.s32 %s30, %s37
      %s72 = sor.u32 %s70, %s71
      %p73 = scmp.eq.s32.totalorder %s72, 0
      %s75 = sadd.s32 %s74, 1
      %s76 = scalar_select %p73, %s74, %s75
      %p79 = pneg %p73
      %p80 = scmp.eq.s32.totalorder %s22, 1
      %p81 = por %p79, %p80
      %p82 = scmp.ne.s32.totalorder %s74, %s77
      %p83 = scmp.eq.s32.totalorder %s22, 0
      %p84 = por %p82, %p83
      %p85 = scmp.ne.s32.totalorder %s74, %s77
      %p86 = scmp.eq.s32.totalorder %s27, 1
      %p87 = por %p85, %p86
      %p88 = scmp.ne.s32.totalorder %s77, %s78
      %p89 = scmp.eq.s32.totalorder %s27, 0
      %p90 = por %p88, %p89
      %p91 = scmp.ne.s32.totalorder %s77, %s78
      %p92 = scmp.eq.s32.totalorder %s28, 1
      %p93 = por %p91, %p92
      %p95 = scmp.ne.s32.totalorder %s78, %s94
      %p96 = scmp.eq.s32.totalorder %s28, 0
      %p97 = por %p95, %p96
      %p98 = scmp.le.s32.totalorder 1, %s22
      %p99 = scmp.lt.s32.totalorder %s22, 3
      %p100 = pnand %p98, %p99
      %p101 = pneg %p100
      // Predicated region
      $region9: #{tpu_custom_call.1} parent=5 // pred_check
        _
      $region10: #{tpu_custom_call.1} parent=5 // pred_check_branch
        %103 = sbr.rel (%p100) target = $region12
      $region11: #{tpu_custom_call.1} parent=5 // pred_region
        %s104 = ssub.s32 %s22, 1
      $region12: #{tpu_custom_call.1} parent=5 // pred_fallthru
        _
      %p105 = scmp.lt.s32.totalorder %s22, 2
      // Predicated region
      $region13: #{tpu_custom_call.1} parent=5 // pred_check
        %p106 = pneg %p105
      $region14: #{tpu_custom_call.1} parent=5 // pred_check_branch
        %108 = sbr.rel (%p106) target = $region16
      $region15: #{tpu_custom_call.1} parent=5 // pred_region
        // Predicated region
        $region17: #{tpu_custom_call.1} parent=15 // pred_check
          %p109 = pneg %p56
        $region18: #{tpu_custom_call.1} parent=15 // pred_check_branch
          %111 = sbr.rel (%p109) target = $region20
        $region19: #{tpu_custom_call.1} parent=15 // pred_region
          %s112 = sand.u32 %s46, 1
          %s113 = scalar_lea.sflag [#allocation6], %s112
          %s114 = sand.u32 %s46, 1
          %s115 = smul.addr %s114, 4
          %s116 = scalar_lea.vmem [#allocation5], %s115
          %118 = vsyncadd %s113, 0
          %s119 = sadd.s32 %s30, %s29
          %s120 = smul.addr %s119, 4
          %s121 = scalar_lea.hbm %s1, %s120
          %s123 = sshll.u32 %s121, 4
          %s124 = int_to_ptr.hbm [resolvable:$true] %s123
          %s125 = sshll.u32 %s116, 4
          %s126 = int_to_ptr.vmem [resolvable:$true] %s125
          %128 = dma.hbm_to_vmem [thread:$0]  %s124, 64, %s126, %s113
        $region20: #{tpu_custom_call.1} parent=15 // pred_fallthru
          _
      $region16: #{tpu_custom_call.1} parent=5 // pred_fallthru
        _
      %p129 = scmp.le.s32.totalorder 1, %s22
      %p130 = scmp.lt.s32.totalorder %s22, 3
      %p131 = pnand %p129, %p130
      %p132 = pneg %p131
      // Predicated region
      $region21: #{tpu_custom_call.1} parent=5 // pred_check
        _
      $region22: #{tpu_custom_call.1} parent=5 // pred_check_branch
        %134 = sbr.rel (%p131) target = $region24
      $region23: #{tpu_custom_call.1} parent=5 // pred_region
        %s135 = ssub.s32 %s22, 1
        %s136 = sand.u32 %s49, 1
        %s137 = scalar_lea.sflag [#allocation6], %s136
        %s138 = sand.u32 %s49, 1
        %s139 = smul.addr %s138, 4
        %s140 = scalar_lea.vmem [#allocation5], %s139
        // Predicated region
        $region25: #{tpu_custom_call.1} parent=23 // pred_check
          %p141 = pneg %p62
        $region26: #{tpu_custom_call.1} parent=23 // pred_check_branch
          %143 = sbr.rel (%p141) target = $region28
        $region27: #{tpu_custom_call.1} parent=23 // pred_region
          %145 = dma.done %s137, 64
        $region28: #{tpu_custom_call.1} parent=23 // pred_fallthru
          _
        %s146 = sand.u32 %s49, 1
        %s147 = scalar_lea.sflag [#allocation6], %s146
        %s148 = sand.u32 %s49, 1
        %s149 = smul.addr %s148, 4
        %s150 = scalar_lea.vmem [#allocation5], %s149
        %p151 = pneg %p62
        %p152 = pneg %p59
        %p153 = pneg %p90
        %p154 = pneg %p87
        %s155 = sand.u32 %s77, 1
        %s156 = scalar_lea.sflag [#allocation7], %s155
        %s157 = sand.u32 %s77, 1
        %s158 = smul.addr %s157, 4
        %s159 = scalar_lea.vmem [#allocation8], %s158
        %s160 = sld [smem:[#allocation4 + %s31]]
        %v161 = vld [vmem:[%s140] sm:$0xf]
        %vm162 = vcmask 125952
        %163 = vst.msk [vmem:[#allocation2] sm:$0xf] %vm162, %v161
        %165 = vrot.lane.b32.xlu0 %v161, 2
        %v166 = vpop.permute.xlu0 %165
        %vm168 = vcmask 134272
        %169 = vst.msk [vmem:[#allocation2] sm:$0xf] %vm168, %v166
        %170 = vrot.lane.b32.xlu0 %v161, 124
        %v171 = vpop.permute.xlu0 %170
        %vm173 = vcmask 1036272
        %174 = vst.msk [vmem:[#allocation2] sm:$0xf] %vm173, %v171
        %175 = vrot.lane.b32.xlu0 %v161, 4
        %v176 = vpop.permute.xlu0 %175
        %vm178 = vcmask 142472
        %179 = vst.msk [vmem:[#allocation2] sm:$0xf] %vm178, %v176
        %180 = vrot.lane.b32.xlu0 %v161, 126
        %v181 = vpop.permute.xlu0 %180
        %vm183 = vcmask 1044472
        %184 = vst.msk [vmem:[#allocation2] sm:$0xf] %vm183, %v181
        %p185 = scmp.lt.s32.totalorder %s160, 0
        %s186 = scalar_select %p185, 128, 0
        %s187 = sadd.s32 %s160, %s186
        %v188 = vld [vmem:[#allocation2] sm:$0xf]
        %s189 = sand.u32 %s187, 127
        %s190 = sand.u32 %s189, 127
        %191 = vrot.lane.b32.xlu0 %v188, %s190
        %v192 = vpop.permute.xlu0 %191
        %193 = vst.msk [vmem:[%s159] sm:$0xf] %vm162, %v192
        %s194 = sand.u32 %s77, 1
        %s195 = scalar_lea.sflag [#allocation7], %s194
        %s196 = sand.u32 %s77, 1
        %s197 = smul.addr %s196, 4
        %s198 = scalar_lea.vmem [#allocation8], %s197
        // Predicated region
        $region29: #{tpu_custom_call.1} parent=23 // pred_check
          %p199 = pneg %p87
        $region30: #{tpu_custom_call.1} parent=23 // pred_check_branch
          %201 = sbr.rel (%p199) target = $region32
        $region31: #{tpu_custom_call.1} parent=23 // pred_region
          %203 = vsyncadd %s195, 0
          %s204 = sadd.s32 %s32, %s31
          %s205 = smul.addr %s204, 4
          %s206 = scalar_lea.hbm %s2, %s205
          %s208 = sshll.u32 %s198, 4
          %s209 = int_to_ptr.vmem [resolvable:$true] %s208
          %s210 = sshll.u32 %s206, 4
          %s211 = int_to_ptr.hbm [resolvable:$true] %s210
          %213 = dma.vmem_to_hbm [thread:$0]  %s209, 64, %s211, %s195
        $region32: #{tpu_custom_call.1} parent=23 // pred_fallthru
          _
      $region24: #{tpu_custom_call.1} parent=5 // pred_fallthru
        _
      %p214 = scmp.le.s32.totalorder 2, %s22
      // Predicated region
      $region33: #{tpu_custom_call.1} parent=5 // pred_check
        %p215 = pneg %p214
      $region34: #{tpu_custom_call.1} parent=5 // pred_check_branch
        %217 = sbr.rel (%p215) target = $region36
      $region35: #{tpu_custom_call.1} parent=5 // pred_region
        %s218 = ssub.s32 %s22, 2
        // Predicated region
        $region37: #{tpu_custom_call.1} parent=35 // pred_check
          %p219 = pneg %p93
        $region38: #{tpu_custom_call.1} parent=35 // pred_check_branch
          %221 = sbr.rel (%p219) target = $region40
        $region39: #{tpu_custom_call.1} parent=35 // pred_region
          %s222 = sand.u32 %s78, 1
          %s223 = scalar_lea.sflag [#allocation7], %s222
          %s224 = sand.u32 %s78, 1
          %s225 = smul.addr %s224, 4
          %s226 = scalar_lea.vmem [#allocation8], %s225
          %228 = dma.done %s223, 64
        $region40: #{tpu_custom_call.1} parent=35 // pred_fallthru
          _
      $region36: #{tpu_custom_call.1} parent=5 // pred_fallthru
        _
    $region6: #{tpu_custom_call.1} parent=1 // loop_footer
      %s26 = sadd.s32 1, %s22
    $region7: #{tpu_custom_call.1} parent=1 // loop_footer_branch
      %21 = sbr.rel target = $region3
    $region8: #{tpu_custom_call.1} parent=1 // loop_exit
      _
    %229 = vsyncpa [#allocation6], 1
    %s230 = scalar_lea.sflag [#allocation6], 1
    %231 = vsyncpa %s230, 1
    %232 = vsyncpa [#allocation7], 1
    %s233 = scalar_lea.sflag [#allocation7], 1
    %234 = vsyncpa %s233, 1

</llo_original>
